<compile_context>
chip_gen: v6e
topology: v6e:2x2x1
jax: 0.10.0
libtpu: 0.0.40
codegen_flags: <defaults>
</compile_context>

<pallas_src>
import functools

import jax
import jax.numpy as jnp
from jax.experimental import pallas as pl
from jax.experimental.pallas import tpu as pltpu


def _round_up(x, m):
    return ((x + m - 1) // m) * m


# ----------------------------------------------------------------------------
# Plain-JAX glue: im2patch / patch2im (N3Net/IGNN `ops` equivalents)
# ----------------------------------------------------------------------------
def im2patch(x, patchsize, stride, padding=None, returnpadding=False):
    """Extract sliding patches -> (b, c, p, p, n1, n2).

    Zero-pads bottom/right (when padding is None) so the stride-grid of
    patches covers the padded image, matching ops.im2patch's convention.
    Padding tuple order: (top, bottom, left, right).
    """
    b, c, h, w = x.shape
    if padding is None:
        padtop = padleft = 0
        padbottom = (stride - (h - patchsize) % stride) % stride
        padright = (stride - (w - patchsize) % stride) % stride
        padding = (padtop, padbottom, padleft, padright)
    padtop, padbottom, padleft, padright = padding
    xp = jnp.pad(x, ((0, 0), (0, 0), (padtop, padbottom), (padleft, padright)))
    hp = h + padtop + padbottom
    wp = w + padleft + padright
    n1 = (hp - patchsize) // stride + 1
    n2 = (wp - patchsize) // stride + 1
    ii = (jnp.arange(n1) * stride)[:, None] + jnp.arange(patchsize)[None, :]
    jj = (jnp.arange(n2) * stride)[:, None] + jnp.arange(patchsize)[None, :]
    patches = xp[:, :, ii[:, :, None, None], jj[None, None, :, :]]  # (b,c,n1,p,n2,p)
    patches = patches.transpose(0, 1, 3, 5, 2, 4)  # (b, c, p1, p2, n1, n2)
    if returnpadding:
        return patches, padding
    return patches


def patch2im(x_patch, patchsize, stride, padding):
    """Inverse of im2patch: scatter-add patches, average overlaps, crop pad."""
    del patchsize  # equal to x_patch.shape[2:4]
    b, c, p1, p2, n1, n2 = x_patch.shape
    padtop, padbottom, padleft, padright = padding
    hp = (n1 - 1) * stride + p1
    wp = (n2 - 1) * stride + p2
    ii = (jnp.arange(n1) * stride)[:, None] + jnp.arange(p1)[None, :]
    jj = (jnp.arange(n2) * stride)[:, None] + jnp.arange(p2)[None, :]
    xp = x_patch.transpose(0, 1, 4, 2, 5, 3)  # (b, c, n1, p1, n2, p2)
    out = jnp.zeros((b, c, hp, wp), x_patch.dtype)
    out = out.at[:, :, ii[:, :, None, None], jj[None, None, :, :]].add(xp)
    cnt = jnp.zeros((hp, wp), x_patch.dtype)
    cnt = cnt.at[ii[:, :, None, None], jj[None, None, :, :]].add(1.0)
    out = out / cnt[None, None]
    return out[:, :, padtop:hp - padbottom, padleft:wp - padright]


# ----------------------------------------------------------------------------
# Pallas hot path: neighbor-feature gather (GraphAggregation.aggregation)
#   z[b, j, m, :] = yd_flat[b, idx_k[b, m, j], :]
# ----------------------------------------------------------------------------
def _gather_kernel(k, idx_ref, yd_ref, z_ref):
    # idx_ref: VMEM (1, TM, K) int32  -- neighbor indices for this M-block
    # yd_ref : VMEM (1, N, F)         -- full patch database, resident over M
    # z_ref  : VMEM (1, K, TM, F)     -- gathered features (lane-dense in F)
    n = yd_ref.shape[1]
    tm = idx_ref.shape[1]
    yd = yd_ref[0]                                           # (N, F)
    idx = jnp.clip(idx_ref[0], 0, n - 1)                     # (TM, K), clamp OOB
    col = jax.lax.broadcasted_iota(jnp.int32, (tm, n), 1)    # (TM, N)
    for j in range(k):  # K is small and static -> unrolled
        idx_j = idx[:, j:j + 1]                              # (TM, 1)
        one_hot = jnp.where(col == idx_j, 1.0, 0.0).astype(yd.dtype)  # (TM, N)
        # Vectorized gather of TM rows at once via an (otherwise idle) MXU matmul.
        z_ref[0, j] = jnp.dot(one_hot, yd,
                              preferred_element_type=jnp.float32
                              ).astype(z_ref.dtype)


def gather_neighbors(yd_flat, idx_k, tm=128):
    """yd_flat: (B, N, F) float; idx_k: (B, M, K) int -> (B, K, M, F)."""
    B, N, F = yd_flat.shape
    _, M, K = idx_k.shape

    tm = min(tm, _round_up(M, 8))        # TM multiple of 8 (sublane tiling)
    m_pad = _round_up(M, tm)
    idx = idx_k.astype(jnp.int32)
    if m_pad != M:
        idx = jnp.pad(idx, ((0, 0), (0, m_pad - M), (0, 0)))  # padded rows unused

    esize = jnp.dtype(yd_flat.dtype).itemsize
    # Rough VMEM budget: double-buffered database + index tile + output tile.
    est = 2 * (N * F * esize + tm * K * 4 + K * tm * F * esize) + (4 << 20)
    params = {"dimension_semantics": ("parallel", "parallel")}
    if est > (16 << 20):
        # TODO(synk): if the database itself no longer fits VMEM (esp. v7x's
        # 64 MiB), tile the N axis and accumulate masked one-hot matmuls.
        params["vmem_limit_bytes"] = int(min(est, 100 << 20))

    kernel = functools.partial(_gather_kernel, K)
    out = pl.pallas_call(
        kernel,
        out_shape=jax.ShapeDtypeStruct((B, K, m_pad, F), yd_flat.dtype),
        grid_spec=pltpu.PrefetchScalarGridSpec(
            num_scalar_prefetch=0,
            grid=(B, m_pad // tm),
            in_specs=[
                pl.BlockSpec((1, tm, K), lambda b, mi: (b, mi, 0)),
                pl.BlockSpec((1, N, F), lambda b, mi: (b, 0, 0)),
            ],
            out_specs=pl.BlockSpec((1, K, tm, F), lambda b, mi: (b, 0, mi, 0)),
        ),
        compiler_params=pltpu.CompilerParams(**params),
    )(idx, yd_flat)
    return out[:, :, :M, :]


# ----------------------------------------------------------------------------
# GraphAggregation forward (JAX wrapper reproducing the PyTorch module)
# ----------------------------------------------------------------------------
class GraphAggregation:
    def __init__(self, scale, k, patchsize, stride, padding=None):
        self.scale = scale
        self.k = k
        self.patchsize = patchsize
        self.stride = stride
        self.padding = padding

    def __call__(self, y, yd, idx_k):
        y_patch, padding = im2patch(y, self.patchsize, self.stride,
                                    self.padding, returnpadding=True)
        yd_patch = im2patch(yd, self.patchsize, self.stride, self.padding)
        _, _, H, W = y.shape
        _, _, _, _, m1, m2 = y_patch.shape
        b, c, p1, p2, n1, n2 = yd_patch.shape
        n = n1 * n2
        f = c * p1 * p2
        k = self.k
        s = self.scale
        s2 = s * s

        yd_flat = yd_patch.transpose(0, 4, 5, 1, 2, 3).reshape(b, n, f)

        # TODO(synk): cfg.NETWORK.WITH_ADAIN_NROM branch (adaptive instance
        # normalization of z_patch by y_patch statistics) not implemented;
        # the config flag is treated as False here.

        # Pallas gather -> (b, k, m, f).  The torch path builds z_patch
        # (b, m, f, k) and permutes to (b, k, f, m); here only the last two
        # axes need swapping.
        z_kmf = gather_neighbors(yd_flat, idx_k)
        z_kfm = jnp.swapaxes(z_kmf, 2, 3)                    # (b, k, f, m)

        z_sr_patch = z_kfm.reshape(b, k, c // s2, s, s, p1, p2, m1, m2)
        z_sr_patch = z_sr_patch.transpose(0, 1, 2, 5, 3, 6, 4, 7, 8).reshape(
            b, k * (c // s2), p1 * s, p2 * s, m1, m2)
        padding_sr = [p * s for p in padding]
        z_sr = patch2im(z_sr_patch, self.patchsize * s, self.stride * s,
                        padding_sr)
        z_sr = z_sr.reshape(b, k * (c // s2), H * s, W * s)
        return z_sr


# ----------------------------------------------------------------------------
if __name__ == "__main__":
    key = jax.random.PRNGKey(0)
    scale, k, patchsize, stride = 2, 3, 3, 2
    B, Cy, H, W = 2, 4, 16, 16

    ky, kidx = jax.random.split(key)
    y = jax.random.normal(ky, (B, Cy, H, W), dtype=jnp.float32)

    # yd = pixelshuffle_down(y): space-to-depth by `scale`
    yd = (y.reshape(B, Cy, H // scale, scale, W // scale, scale)
            .transpose(0, 1, 3, 5, 2, 4)
            .reshape(B, Cy * scale * scale, H // scale, W // scale))

    # number of query patches (from y) and database patches (from yd)
    def grid_len(sz):
        pad = (stride - (sz - patchsize) % stride) % stride
        return (sz + pad - patchsize) // stride + 1

    m = grid_len(H) * grid_len(W)
    n = grid_len(H // scale) * grid_len(W // scale)
    idx_k = jax.random.randint(kidx, (B, m, k), 0, n, dtype=jnp.int32)

    agg = GraphAggregation(scale, k, patchsize, stride)
    z_sr = jax.block_until_ready(agg(y, yd, idx_k))
    assert z_sr.shape == (B, k * Cy, H * scale, W * scale), z_sr.shape
    assert bool(jnp.all(jnp.isfinite(z_sr)))

    # sanity check: Pallas gather vs pure-JAX reference gather.
    # (tolerance is loose enough to cover the MXU running the f32 one-hot
    #  gather matmul through bf16 passes at default precision)
    yd_patch = im2patch(yd, patchsize, stride)
    b_, c_, p1_, p2_, n1_, n2_ = yd_patch.shape
    yd_flat = yd_patch.transpose(0, 4, 5, 1, 2, 3).reshape(
        B, n1_ * n2_, c_ * p1_ * p2_)
    z_pal = jax.block_until_ready(gather_neighbors(yd_flat, idx_k))
    z_pal_mkf = z_pal.transpose(0, 2, 1, 3)                  # (B, m, k, f)
    z_ref = yd_flat[jnp.arange(B)[:, None, None], idx_k]     # (B, m, k, f)
    assert jnp.allclose(z_pal_mkf, z_ref, atol=2.5e-2, rtol=1e-2)

    print("KERNEL_OK")
</pallas_src>

<mosaic_0001>
module attributes {stable_mosaic.version = 11 : i64} {
  func.func @_gather_kernel(%arg0: i32, %arg1: i32, %arg2: memref<1x64x3xi32, #tpu.memory_space<vmem>>, %arg3: memref<1x16x144xf32, #tpu.memory_space<vmem>>, %arg4: memref<1x3x64x144xf32, #tpu.memory_space<vmem>>) attributes {dimension_semantics = [#tpu.dimension_semantics<parallel>, #tpu.dimension_semantics<parallel>], iteration_bounds = array<i64: 2, 1>, scalar_prefetch = 0 : i64, scratch_operands = 0 : i64, tpu.core_type = #tpu.core_type<tc>, window_params = [{transform_indices = @transform_0, window_bounds = array<i64: 1, 64, 3>}, {transform_indices = @transform_1, window_bounds = array<i64: 1, 16, 144>}, {transform_indices = @transform_2, window_bounds = array<i64: 1, 3, 64, 144>}]} {
    %c0 = arith.constant 0 : index
    %c0_0 = arith.constant 0 : index
    %c0_1 = arith.constant 0 : index
    %0 = vector.load %arg3[%c0, %c0_0, %c0_1] : memref<1x16x144xf32, #tpu.memory_space<vmem>>, vector<1x16x144xf32>
    %1 = vector.shape_cast %0 : vector<1x16x144xf32> to vector<16x144xf32>
    %c0_2 = arith.constant 0 : index
    %c0_3 = arith.constant 0 : index
    %c0_4 = arith.constant 0 : index
    %2 = vector.load %arg2[%c0_2, %c0_3, %c0_4] : memref<1x64x3xi32, #tpu.memory_space<vmem>>, vector<1x64x3xi32>
    %3 = vector.shape_cast %2 : vector<1x64x3xi32> to vector<64x3xi32>
    %c0_i32 = arith.constant 0 : i32
    %c15_i32 = arith.constant 15 : i32
    %4 = vector.broadcast %c0_i32 : i32 to vector<64x3xi32>
    %5 = arith.maxsi %4, %3 : vector<64x3xi32>
    %6 = vector.broadcast %c15_i32 : i32 to vector<64x3xi32>
    %7 = arith.minsi %6, %5 : vector<64x3xi32>
    %8 = tpu.iota {dimensions = array<i32: 1>} : vector<64x16xi32>
    %9 = vector.extract_strided_slice %7 {offsets = [0, 0], sizes = [64, 1], strides = [1, 1]} : vector<64x3xi32> to vector<64x1xi32>
    %10 = vector.broadcast %9 : vector<64x1xi32> to vector<64x16xi32>
    %11 = arith.cmpi eq, %8, %10 : vector<64x16xi32>
    %cst = arith.constant 1.000000e+00 : f32
    %cst_5 = arith.constant 0.000000e+00 : f32
    %12 = vector.broadcast %cst : f32 to vector<64x16xf32>
    %13 = vector.broadcast %cst_5 : f32 to vector<64x16xf32>
    %14 = arith.select %11, %12, %13 : vector<64x16xi1>, vector<64x16xf32>
    %cst_6 = arith.constant dense<0.000000e+00> : vector<64x144xf32>
    %15 = tpu.matmul %14, %1, %cst_6 {dimension_numbers = #tpu.dot_dimension_numbers<[1], [0], [0], [1], [0, 0, 1, 1], [], []>} : vector<64x16xf32>, vector<16x144xf32>, vector<64x144xf32> -> vector<64x144xf32>
    %c0_7 = arith.constant 0 : index
    %c0_8 = arith.constant 0 : index
    %c0_9 = arith.constant 0 : index
    %c0_10 = arith.constant 0 : index
    %16 = vector.load %arg4[%c0_7, %c0_8, %c0_9, %c0_10] : memref<1x3x64x144xf32, #tpu.memory_space<vmem>>, vector<1x1x64x144xf32>
    %17 = vector.shape_cast %16 : vector<1x1x64x144xf32> to vector<64x144xf32>
    %18 = vector.shape_cast %15 : vector<64x144xf32> to vector<1x1x64x144xf32>
    tpu.vector_store %arg4[%c0_7, %c0_8, %c0_9, %c0_10], %18 {strides = array<i32>} : memref<1x3x64x144xf32, #tpu.memory_space<vmem>>, vector<1x1x64x144xf32>,
    %19 = vector.extract_strided_slice %7 {offsets = [0, 1], sizes = [64, 1], strides = [1, 1]} : vector<64x3xi32> to vector<64x1xi32>
    %20 = vector.broadcast %19 : vector<64x1xi32> to vector<64x16xi32>
    %21 = arith.cmpi eq, %8, %20 : vector<64x16xi32>
    %cst_11 = arith.constant 1.000000e+00 : f32
    %cst_12 = arith.constant 0.000000e+00 : f32
    %22 = vector.broadcast %cst_11 : f32 to vector<64x16xf32>
    %23 = vector.broadcast %cst_12 : f32 to vector<64x16xf32>
    %24 = arith.select %21, %22, %23 : vector<64x16xi1>, vector<64x16xf32>
    %cst_13 = arith.constant dense<0.000000e+00> : vector<64x144xf32>
    %25 = tpu.matmul %24, %1, %cst_13 {dimension_numbers = #tpu.dot_dimension_numbers<[1], [0], [0], [1], [0, 0, 1, 1], [], []>} : vector<64x16xf32>, vector<16x144xf32>, vector<64x144xf32> -> vector<64x144xf32>
    %c0_14 = arith.constant 0 : index
    %c1 = arith.constant 1 : index
    %c0_15 = arith.constant 0 : index
    %c0_16 = arith.constant 0 : index
    %26 = vector.load %arg4[%c0_14, %c1, %c0_15, %c0_16] : memref<1x3x64x144xf32, #tpu.memory_space<vmem>>, vector<1x1x64x144xf32>
    %27 = vector.shape_cast %26 : vector<1x1x64x144xf32> to vector<64x144xf32>
    %28 = vector.shape_cast %25 : vector<64x144xf32> to vector<1x1x64x144xf32>
    tpu.vector_store %arg4[%c0_14, %c1, %c0_15, %c0_16], %28 {strides = array<i32>} : memref<1x3x64x144xf32, #tpu.memory_space<vmem>>, vector<1x1x64x144xf32>,
    %29 = vector.extract_strided_slice %7 {offsets = [0, 2], sizes = [64, 1], strides = [1, 1]} : vector<64x3xi32> to vector<64x1xi32>
    %30 = vector.broadcast %29 : vector<64x1xi32> to vector<64x16xi32>
    %31 = arith.cmpi eq, %8, %30 : vector<64x16xi32>
    %cst_17 = arith.constant 1.000000e+00 : f32
    %cst_18 = arith.constant 0.000000e+00 : f32
    %32 = vector.broadcast %cst_17 : f32 to vector<64x16xf32>
    %33 = vector.broadcast %cst_18 : f32 to vector<64x16xf32>
    %34 = arith.select %31, %32, %33 : vector<64x16xi1>, vector<64x16xf32>
    %cst_19 = arith.constant dense<0.000000e+00> : vector<64x144xf32>
    %35 = tpu.matmul %34, %1, %cst_19 {dimension_numbers = #tpu.dot_dimension_numbers<[1], [0], [0], [1], [0, 0, 1, 1], [], []>} : vector<64x16xf32>, vector<16x144xf32>, vector<64x144xf32> -> vector<64x144xf32>
    %c0_20 = arith.constant 0 : index
    %c2 = arith.constant 2 : index
    %c0_21 = arith.constant 0 : index
    %c0_22 = arith.constant 0 : index
    %36 = vector.load %arg4[%c0_20, %c2, %c0_21, %c0_22] : memref<1x3x64x144xf32, #tpu.memory_space<vmem>>, vector<1x1x64x144xf32>
    %37 = vector.shape_cast %36 : vector<1x1x64x144xf32> to vector<64x144xf32>
    %38 = vector.shape_cast %35 : vector<64x144xf32> to vector<1x1x64x144xf32>
    tpu.vector_store %arg4[%c0_20, %c2, %c0_21, %c0_22], %38 {strides = array<i32>} : memref<1x3x64x144xf32, #tpu.memory_space<vmem>>, vector<1x1x64x144xf32>,
    return
  }
  func.func @transform_0(%arg0: i32, %arg1: i32) -> (i32, i32, i32) {
    %c0_i32 = arith.constant 0 : i32
    %c0_i32_0 = arith.constant 0 : i32
    return %arg0, %arg1, %c0_i32 : i32, i32, i32
  }
  func.func @transform_1(%arg0: i32, %arg1: i32) -> (i32, i32, i32) {
    %c0_i32 = arith.constant 0 : i32
    %c0_i32_0 = arith.constant 0 : i32
    %c0_i32_1 = arith.constant 0 : i32
    return %arg0, %c0_i32, %c0_i32_0 : i32, i32, i32
  }
  func.func @transform_2(%arg0: i32, %arg1: i32) -> (i32, i32, i32, i32) {
    %c0_i32 = arith.constant 0 : i32
    %c0_i32_0 = arith.constant 0 : i32
    %c0_i32_1 = arith.constant 0 : i32
    return %arg0, %c0_i32, %arg1, %c0_i32_0 : i32, i32, i32, i32
  }
}

</mosaic_0001>

<llo_original>
// kernel: tpu_custom_call.1
$region0: #{tpu_custom_call.1}
  #allocation0 [shape = 'u32[]', space=smem, size = 0x4, offset = 0x4, fixed_abs, tag = 'smem constant byte address 0x4 - core index']
  #allocation1 [shape = 'u32[144,128]{1,0:T(1,128)}', space=vmem, size = 0x12000, scoped, tag = 'internal scratch']
  %s0 = inlined_call_operand.vmem [shape: s32[2,64,3], index: 0, kind: input, shape index: {}]
  %s1 = inlined_call_operand.vmem [shape: f32[2,16,144], index: 1, kind: input, shape index: {}]
  %s2 = inlined_call_operand.hbm [shape: f32[2,3,64,144], index: 2, kind: output, shape index: {}]
  %s3 = sld [smem:[#allocation0]]
  $region41: #{tpu_custom_call.1} parent=0
    _
  %s5 = ssub.s32 1, %s3
  %s6 = scalar_select 0, %s5, %s3
  $region1: #{tpu_custom_call.1} parent=0
    #allocation2 [shape = 'u8[393216]{0}', space=vmem, size = 0x60000, scoped, tag = 'output window, operand 0']
    #allocation3 [shape = 's32[2]{0}', space=sflag, size = 0x8, scoped, tag = 'scoped memory for tpu_custom_call.1']
    %7 = vsyncpa [#allocation3], 0
    %s8 = scalar_lea.sflag [#allocation3], 1
    %9 = vsyncpa %s8, 0
    loop: start=0, step=1, limit=4
    $region2: #{tpu_custom_call.1} parent=1 // loop_pre_header
      _
    $region3: #{tpu_custom_call.1} parent=1 // loop_header
      %s11 = sphi 0, %s15
      %p12 = scmp.ge.s32.totalorder %s11, 4
      %s18 = sphi 0, %s30
      %s19 = sphi 0, %s26
      %s20 = sphi 0, %s18
      %s21 = sphi 0, %s19
      %s22 = sphi 0, %s20
      %s23 = sphi 0, %s21
      %s35 = sphi 0, %s37
      %s38 = sphi 0, %s35
      %s39 = sphi 0, %s38
      %s55 = sphi 0, %s39
      %s61 = sphi 0, %s63
      %s64 = sphi 0, %s61
      %s65 = sphi 0, %s64
      %s81 = sphi 0, %s65
      %s89 = sphi 0, %s91
      %s92 = sphi 0, %s89
      %s93 = sphi 0, %s92
      %s109 = sphi 0, %s93
    $region4: #{tpu_custom_call.1} parent=1 // loop_header_branch
      %14 = sbr.rel (%p12) target = $region8
    $region5: #{tpu_custom_call.1} parent=1 // loop_body
      %s16 = ssub.s32 %s11, 1
      %s17 = ssub.s32 %s11, 2
      %s24 = sadd.s32 1, %s19
      %p25 = scmp.ge.s32.totalorder %s24, 1
      %s26 = scalar_select %p25, 0, %s24
      %s27 = sadd.s32 1, %s18
      %s28 = scalar_select %p25, %s27, %s18
      %p29 = scmp.ge.s32.totalorder %s28, 2
      %s30 = scalar_select %p29, 0, %s28
      %s31 = ssub.s32 %s18, %s30
      %s32 = ssub.s32 %s19, %s26
      %s33 = sor.u32 %s31, %s32
      %p34 = scmp.eq.s32.totalorder %s33, 0
      %s36 = sadd.s32 %s35, 1
      %s37 = scalar_select %p34, %s35, %s36
      %p40 = pneg %p34
      %p41 = scmp.eq.s32.totalorder %s11, 1
      %p42 = por %p40, %p41
      %p43 = scmp.ne.s32.totalorder %s35, %s38
      %p44 = scmp.eq.s32.totalorder %s11, 0
      %p45 = por %p43, %p44
      %p46 = scmp.ne.s32.totalorder %s35, %s38
      %p47 = scmp.eq.s32.totalorder %s16, 1
      %p48 = por %p46, %p47
      %p49 = scmp.ne.s32.totalorder %s38, %s39
      %p50 = scmp.eq.s32.totalorder %s16, 0
      %p51 = por %p49, %p50
      %p52 = scmp.ne.s32.totalorder %s38, %s39
      %p53 = scmp.eq.s32.totalorder %s17, 1
      %p54 = por %p52, %p53
      %p56 = scmp.ne.s32.totalorder %s39, %s55
      %p57 = scmp.eq.s32.totalorder %s17, 0
      %p58 = por %p56, %p57
      %s59 = ssub.s32 %s18, %s30
      %p60 = scmp.eq.s32.totalorder %s59, 0
      %s62 = sadd.s32 %s61, 1
      %s63 = scalar_select %p60, %s61, %s62
      %p66 = pneg %p60
      %p67 = scmp.eq.s32.totalorder %s11, 1
      %p68 = por %p66, %p67
      %p69 = scmp.ne.s32.totalorder %s61, %s64
      %p70 = scmp.eq.s32.totalorder %s11, 0
      %p71 = por %p69, %p70
      %p72 = scmp.ne.s32.totalorder %s61, %s64
      %p73 = scmp.eq.s32.totalorder %s16, 1
      %p74 = por %p72, %p73
      %p75 = scmp.ne.s32.totalorder %s64, %s65
      %p76 = scmp.eq.s32.totalorder %s16, 0
      %p77 = por %p75, %p76
      %p78 = scmp.ne.s32.totalorder %s64, %s65
      %p79 = scmp.eq.s32.totalorder %s17, 1
      %p80 = por %p78, %p79
      %p82 = scmp.ne.s32.totalorder %s65, %s81
      %p83 = scmp.eq.s32.totalorder %s17, 0
      %p84 = por %p82, %p83
      %s85 = ssub.s32 %s18, %s30
      %s86 = ssub.s32 %s19, %s26
      %s87 = sor.u32 %s85, %s86
      %p88 = scmp.eq.s32.totalorder %s87, 0
      %s90 = sadd.s32 %s89, 1
      %s91 = scalar_select %p88, %s89, %s90
      %p94 = pneg %p88
      %p95 = scmp.eq.s32.totalorder %s11, 1
      %p96 = por %p94, %p95
      %p97 = scmp.ne.s32.totalorder %s89, %s92
      %p98 = scmp.eq.s32.totalorder %s11, 0
      %p99 = por %p97, %p98
      %p100 = scmp.ne.s32.totalorder %s89, %s92
      %p101 = scmp.eq.s32.totalorder %s16, 1
      %p102 = por %p100, %p101
      %p103 = scmp.ne.s32.totalorder %s92, %s93
      %p104 = scmp.eq.s32.totalorder %s16, 0
      %p105 = por %p103, %p104
      %p106 = scmp.ne.s32.totalorder %s92, %s93
      %p107 = scmp.eq.s32.totalorder %s17, 1
      %p108 = por %p106, %p107
      %p110 = scmp.ne.s32.totalorder %s93, %s109
      %p111 = scmp.eq.s32.totalorder %s17, 0
      %p112 = por %p110, %p111
      %p113 = scmp.le.s32.totalorder 1, %s11
      %p114 = scmp.lt.s32.totalorder %s11, 3
      %p115 = pnand %p113, %p114
      %p116 = pneg %p115
      // Predicated region
      $region9: #{tpu_custom_call.1} parent=5 // pred_check
        _
      $region10: #{tpu_custom_call.1} parent=5 // pred_check_branch
        %118 = sbr.rel (%p115) target = $region12
      $region11: #{tpu_custom_call.1} parent=5 // pred_region
        %s119 = ssub.s32 %s11, 1
      $region12: #{tpu_custom_call.1} parent=5 // pred_fallthru
        _
      %p120 = scmp.lt.s32.totalorder %s11, 2
      // Predicated region
      $region13: #{tpu_custom_call.1} parent=5 // pred_check
        %p121 = pneg %p120
      $region14: #{tpu_custom_call.1} parent=5 // pred_check_branch
        %123 = sbr.rel (%p121) target = $region16
      $region15: #{tpu_custom_call.1} parent=5 // pred_region
        // Predicated region
        $region17: #{tpu_custom_call.1} parent=15 // pred_check
          %p124 = pneg %p45
        $region18: #{tpu_custom_call.1} parent=15 // pred_check_branch
          %126 = sbr.rel (%p124) target = $region20
        $region19: #{tpu_custom_call.1} parent=15 // pred_region
          %s127 = smul.u32 8, %s19
          %p128 = scmp.lt.s32.totalorder %s18, 1
          %s129 = scalar_select %p128, %s18, 1
          %p130 = scmp.lt.s32.totalorder %s127, 7
          %s131 = scalar_select %p130, %s127, 7
          %s132 = smul.addr %s129, 8
          %s133 = sadd.s32 %s131, %s132
          %s134 = smul.addr %s133, 8
          %s135 = scalar_lea.vmem %s0, %s134
          %s136 = smul.u32 8, %s19
        $region20: #{tpu_custom_call.1} parent=15 // pred_fallthru
          _
        // Predicated region
        $region21: #{tpu_custom_call.1} parent=15 // pred_check
          %p137 = pneg %p71
        $region22: #{tpu_custom_call.1} parent=15 // pred_check_branch
          %139 = sbr.rel (%p137) target = $region24
        $region23: #{tpu_custom_call.1} parent=15 // pred_region
          %p140 = scmp.lt.s32.totalorder %s18, 1
          %s141 = scalar_select %p140, %s18, 1
          %s142 = smul.addr %s141, 4
          %s143 = smul.addr %s142, 8
          %s144 = scalar_lea.vmem %s1, %s143
        $region24: #{tpu_custom_call.1} parent=15 // pred_fallthru
          _
      $region16: #{tpu_custom_call.1} parent=5 // pred_fallthru
        _
      %p145 = scmp.le.s32.totalorder 1, %s11
      %p146 = scmp.lt.s32.totalorder %s11, 3
      %p147 = pnand %p145, %p146
      %p148 = pneg %p147
      // Predicated region
      $region25: #{tpu_custom_call.1} parent=5 // pred_check
        _
      $region26: #{tpu_custom_call.1} parent=5 // pred_check_branch
        %150 = sbr.rel (%p147) target = $region28
      $region27: #{tpu_custom_call.1} parent=5 // pred_region
        %s151 = ssub.s32 %s11, 1
        %s152 = smul.u32 8, %s21
        %p153 = scmp.lt.s32.totalorder %s20, 1
        %s154 = scalar_select %p153, %s20, 1
        %p155 = scmp.lt.s32.totalorder %s152, 7
        %s156 = scalar_select %p155, %s152, 7
        %s157 = smul.addr %s154, 8
        %s158 = sadd.s32 %s156, %s157
        %s159 = smul.addr %s158, 8
        %s160 = scalar_lea.vmem %s0, %s159
        %p161 = pneg %p51
        %p162 = pneg %p48
        %p163 = scmp.lt.s32.totalorder %s20, 1
        %s164 = scalar_select %p163, %s20, 1
        %s165 = smul.addr %s164, 4
        %s166 = smul.addr %s165, 8
        %s167 = scalar_lea.vmem %s1, %s166
        %p168 = pneg %p77
        %p169 = pneg %p74
        %p170 = pneg %p105
        %p171 = pneg %p102
        %s172 = sand.u32 %s92, 1
        %s173 = scalar_lea.sflag [#allocation3], %s172
        %s174 = sand.u32 %s92, 1
        %s175 = smul.addr %s174, 384
        %s176 = scalar_lea.vmem [#allocation2], %s175
        %s177 = smul.u32 8, %s21
        %p178 = scmp.lt.s32.totalorder %s20, 1
        %s179 = scalar_select %p178, %s20, 1
        %p180 = scmp.lt.s32.totalorder %s177, 7
        %s181 = scalar_select %p180, %s177, 7
        %s182 = smul.addr %s179, 8
        %s183 = sadd.s32 %s181, %s182
        %s184 = smul.addr %s183, 8
        %s185 = scalar_lea.vmem %s0, %s184
        %s186 = smul.u32 8, %s21
        %p187 = scmp.lt.s32.totalorder %s20, 1
        %s188 = scalar_select %p187, %s20, 1
        %s189 = smul.addr %s188, 4
        %s190 = smul.addr %s189, 8
        %s191 = scalar_lea.vmem %s1, %s190
        %s192 = smul.u32 8, %s21
        %v193 = vld [vmem:[%s191] sm:$0xff]
        %v194 = vld [vmem:[%s191 + $0x8] sm:$0xff]
        %v195 = vld [vmem:[%s191 + $0x10] sm:$0xff]
        %v196 = vld [vmem:[%s191 + $0x18] sm:$0xff]
        %v197 = vld [vmem:[%s185] sm:$0xff]
        %v198 = vld [vmem:[%s185 + $0x8] sm:$0xff]
        %v199 = vld [vmem:[%s185 + $0x10] sm:$0xff]
        %v200 = vld [vmem:[%s185 + $0x18] sm:$0xff]
        %v201 = vld [vmem:[%s185 + $0x20] sm:$0xff]
        %v202 = vld [vmem:[%s185 + $0x28] sm:$0xff]
        %v203 = vld [vmem:[%s185 + $0x30] sm:$0xff]
        %v204 = vld [vmem:[%s185 + $0x38] sm:$0xff]
        %vm205 = vcmp.gt.s32.totalorder %v197, 0
        %v206 = vsel %vm205, %v197, 0
        %vm207 = vcmp.gt.s32.totalorder %v198, 0
        %v208 = vsel %vm207, %v198, 0
        %vm209 = vcmp.gt.s32.totalorder %v199, 0
        %v210 = vsel %vm209, %v199, 0
        %vm211 = vcmp.gt.s32.totalorder %v200, 0
        %v212 = vsel %vm211, %v200, 0
        %vm213 = vcmp.gt.s32.totalorder %v201, 0
        %v214 = vsel %vm213, %v201, 0
        %vm215 = vcmp.gt.s32.totalorder %v202, 0
        %v216 = vsel %vm215, %v202, 0
        %vm217 = vcmp.gt.s32.totalorder %v203, 0
        %v218 = vsel %vm217, %v203, 0
        %vm219 = vcmp.gt.s32.totalorder %v204, 0
        %v220 = vsel %vm219, %v204, 0
        %vm221 = vcmp.lt.s32.totalorder %v206, 15
        %v222 = vsel %vm221, %v206, 15
        %vm223 = vcmp.lt.s32.totalorder %v208, 15
        %v224 = vsel %vm223, %v208, 15
        %vm225 = vcmp.lt.s32.totalorder %v210, 15
        %v226 = vsel %vm225, %v210, 15
        %vm227 = vcmp.lt.s32.totalorder %v212, 15
        %v228 = vsel %vm227, %v212, 15
        %vm229 = vcmp.lt.s32.totalorder %v214, 15
        %v230 = vsel %vm229, %v214, 15
        %vm231 = vcmp.lt.s32.totalorder %v216, 15
        %v232 = vsel %vm231, %v216, 15
        %vm233 = vcmp.lt.s32.totalorder %v218, 15
        %v234 = vsel %vm233, %v218, 15
        %vm235 = vcmp.lt.s32.totalorder %v220, 15
        %v236 = vsel %vm235, %v220, 15
        %v237 = vlaneseq
        %v238 = vand.u32 %v237, 127
        %239 = vset.pattern.permute.xlu0 0
        %240 = vperm.xlu0 %239, %v222
        %v241 = vpop.permute.xlu0 %240
        %242 = vset.pattern.permute.xlu0 0
        %243 = vperm.xlu0 %242, %v224
        %v244 = vpop.permute.xlu0 %243
        %245 = vset.pattern.permute.xlu0 0
        %246 = vperm.xlu0 %245, %v226
        %v247 = vpop.permute.xlu0 %246
        %248 = vset.pattern.permute.xlu0 0
        %249 = vperm.xlu0 %248, %v228
        %v250 = vpop.permute.xlu0 %249
        %251 = vset.pattern.permute.xlu0 0
        %252 = vperm.xlu0 %251, %v230
        %v253 = vpop.permute.xlu0 %252
        %254 = vset.pattern.permute.xlu0 0
        %255 = vperm.xlu0 %254, %v232
        %v256 = vpop.permute.xlu0 %255
        %257 = vset.pattern.permute.xlu0 0
        %258 = vperm.xlu0 %257, %v234
        %v259 = vpop.permute.xlu0 %258
        %260 = vset.pattern.permute.xlu0 0
        %261 = vperm.xlu0 %260, %v236
        %v262 = vpop.permute.xlu0 %261
        %vm263 = vcmp.eq.s32.totalorder %v238, %v241
        %vm264 = vcmp.eq.s32.totalorder %v238, %v244
        %vm265 = vcmp.eq.s32.totalorder %v238, %v247
        %vm266 = vcmp.eq.s32.totalorder %v238, %v250
        %vm267 = vcmp.eq.s32.totalorder %v238, %v253
        %vm268 = vcmp.eq.s32.totalorder %v238, %v256
        %vm269 = vcmp.eq.s32.totalorder %v238, %v259
        %vm270 = vcmp.eq.s32.totalorder %v238, %v262
        %v271 = vsel %vm263, 1.0, 0.0
        %v272 = vsel %vm264, 1.0, 0.0
        %v273 = vsel %vm265, 1.0, 0.0
        %v274 = vsel %vm266, 1.0, 0.0
        %v275 = vsel %vm267, 1.0, 0.0
        %v276 = vsel %vm268, 1.0, 0.0
        %v277 = vsel %vm269, 1.0, 0.0
        %v278 = vsel %vm270, 1.0, 0.0
        %vm279 = vcmask 130048
        %v281 = vsel %vm279, %v271, 0
        %v284 = vsel %vm279, %v272, 0
        %v287 = vsel %vm279, %v273, 0
        %v290 = vsel %vm279, %v274, 0
        %v293 = vsel %vm279, %v275, 0
        %v296 = vsel %vm279, %v276, 0
        %v299 = vsel %vm279, %v277, 0
        %v302 = vsel %vm279, %v278, 0
        %304 = vmatprep.subr.mxu0 0.0
        %305 = vmatpush1.msra.mxu0 0.0
        %306 = vmatprep.subr.mxu0 0.0
        %307 = vmatpush1.msra.mxu0 0.0
        %308 = vmatprep.subr.mxu0 0.0
        %309 = vmatpush1.msra.mxu0 0.0
        %310 = vmatprep.subr.mxu0 0.0
        %311 = vmatpush1.msra.mxu0 0.0
        %312 = vmatprep.subr.mxu0 0.0
        %313 = vmatpush1.msra.mxu0 0.0
        %314 = vmatprep.subr.mxu0 0.0
        %315 = vmatpush1.msra.mxu0 0.0
        %316 = vmatprep.subr.mxu0 0.0
        %317 = vmatpush1.msra.mxu0 0.0
        %318 = vmatprep.subr.mxu0 0.0
        %319 = vmatpush1.msra.mxu0 0.0
        %320 = vmatprep.subr.mxu0 0.0
        %321 = vmatpush1.msra.mxu0 0.0
        %322 = vmatprep.subr.mxu0 0.0
        %323 = vmatpush1.msra.mxu0 0.0
        %324 = vmatprep.subr.mxu0 0.0
        %325 = vmatpush1.msra.mxu0 0.0
        %326 = vmatprep.subr.mxu0 0.0
        %327 = vmatpush1.msra.mxu0 0.0
        %328 = vmatprep.subr.mxu0 0.0
        %329 = vmatpush1.msra.mxu0 0.0
        %330 = vmatprep.subr.mxu0 0.0
        %331 = vmatpush1.msra.mxu0 0.0
        %332 = vmatprep.subr.mxu0 %v196
        %333 = vmatpush1.msra.mxu0 %v195
        %334 = vmatprep.subr.mxu0 %v194
        %335 = vmatpush1.msra.mxu0 %v193
        %336 = vmatprep.subr.mxu0 0.0
        %337 = vmatpush2.msra.mxu0 0.0
        %338 = vmatprep.subr.mxu0 0.0
        %339 = vmatpush2.msra.mxu0 0.0
        %340 = vmatprep.subr.mxu0 0.0
        %341 = vmatpush2.msra.mxu0 0.0
        %342 = vmatprep.subr.mxu0 0.0
        %343 = vmatpush2.msra.mxu0 0.0
        %344 = vmatprep.subr.mxu0 0.0
        %345 = vmatpush2.msra.mxu0 0.0
        %346 = vmatprep.subr.mxu0 0.0
        %347 = vmatpush2.msra.mxu0 0.0
        %348 = vmatprep.subr.mxu0 0.0
        %349 = vmatpush2.msra.mxu0 0.0
        %350 = vmatprep.subr.mxu0 0.0
        %351 = vmatpush2.msra.mxu0 0.0
        %352 = vmatprep.subr.mxu0 0.0
        %353 = vmatpush2.msra.mxu0 0.0
        %354 = vmatprep.subr.mxu0 0.0
        %355 = vmatpush2.msra.mxu0 0.0
        %356 = vmatprep.subr.mxu0 0.0
        %357 = vmatpush2.msra.mxu0 0.0
        %358 = vmatprep.subr.mxu0 0.0
        %359 = vmatpush2.msra.mxu0 0.0
        %360 = vmatprep.subr.mxu0 0.0
        %361 = vmatpush2.msra.mxu0 0.0
        %362 = vmatprep.subr.mxu0 0.0
        %363 = vmatpush2.msra.mxu0 0.0
        %364 = vmatprep.subr.mxu0 0.0
        %365 = vmatpush2.msra.mxu0 0.0
        %366 = vmatprep.subr.mxu0 0.0
        %367 = vmatpush2.msra.mxu0 0.0
        %368 = vmatprep.mubr.f32.mxu0 0.0
        %369 = vmatmul.mubr.f32.gmra.mxu0 %v281
        %v370 = vpop.f32.mrf.mxu0
        %v371 = vadd.f32 0.0, %v370
        %v372 = vpop.f32.mrf.mxu0
        %v373 = vadd.f32 0.0, %v372
        %374 = vmatprep.mubr.f32.mxu0 0.0
        %375 = vmatmul.mubr.f32.gmra.mxu0 %v284
        %v376 = vpop.f32.mrf.mxu0
        %v377 = vadd.f32 0.0, %v376
        %v378 = vpop.f32.mrf.mxu0
        %v379 = vadd.f32 0.0, %v378
        %380 = vmatprep.mubr.f32.mxu0 0.0
        %381 = vmatmul.mubr.f32.gmra.mxu0 %v287
        %v382 = vpop.f32.mrf.mxu0
        %v383 = vadd.f32 0.0, %v382
        %v384 = vpop.f32.mrf.mxu0
        %v385 = vadd.f32 0.0, %v384
        %386 = vmatprep.mubr.f32.mxu0 0.0
        %387 = vmatmul.mubr.f32.gmra.mxu0 %v290
        %v388 = vpop.f32.mrf.mxu0
        %v389 = vadd.f32 0.0, %v388
        %v390 = vpop.f32.mrf.mxu0
        %v391 = vadd.f32 0.0, %v390
        %392 = vmatprep.mubr.f32.mxu0 0.0
        %393 = vmatmul.mubr.f32.gmra.mxu0 %v293
        %v394 = vpop.f32.mrf.mxu0
        %v395 = vadd.f32 0.0, %v394
        %v396 = vpop.f32.mrf.mxu0
        %v397 = vadd.f32 0.0, %v396
        %398 = vmatprep.mubr.f32.mxu0 0.0
        %399 = vmatmul.mubr.f32.gmra.mxu0 %v296
        %v400 = vpop.f32.mrf.mxu0
        %v401 = vadd.f32 0.0, %v400
        %v402 = vpop.f32.mrf.mxu0
        %v403 = vadd.f32 0.0, %v402
        %404 = vmatprep.mubr.f32.mxu0 0.0
        %405 = vmatmul.mubr.f32.gmra.mxu0 %v299
        %v406 = vpop.f32.mrf.mxu0
        %v407 = vadd.f32 0.0, %v406
        %v408 = vpop.f32.mrf.mxu0
        %v409 = vadd.f32 0.0, %v408
        %410 = vmatprep.mubr.f32.mxu0 0.0
        %411 = vmatmul.mubr.f32.gmra.mxu0 %v302
        %v412 = vpop.f32.mrf.mxu0
        %v413 = vadd.f32 0.0, %v412
        %v414 = vpop.f32.mrf.mxu0
        %v415 = vadd.f32 0.0, %v414
        %416 = vdwg.mxu0
        %417 = vst [vmem:[%s176] sm:$0xff] %v371
        %418 = vst.msk [vmem:[%s176 + $0x8] sm:$0xff] %vm279, %v373
        %419 = vst [vmem:[%s176 + $0x10] sm:$0xff] %v377
        %420 = vst.msk [vmem:[%s176 + $0x18] sm:$0xff] %vm279, %v379
        %421 = vst [vmem:[%s176 + $0x20] sm:$0xff] %v383
        %422 = vst.msk [vmem:[%s176 + $0x28] sm:$0xff] %vm279, %v385
        %423 = vst [vmem:[%s176 + $0x30] sm:$0xff] %v389
        %424 = vst.msk [vmem:[%s176 + $0x38] sm:$0xff] %vm279, %v391
        %425 = vst [vmem:[%s176 + $0x40] sm:$0xff] %v395
        %426 = vst.msk [vmem:[%s176 + $0x48] sm:$0xff] %vm279, %v397
        %427 = vst [vmem:[%s176 + $0x50] sm:$0xff] %v401
        %428 = vst.msk [vmem:[%s176 + $0x58] sm:$0xff] %vm279, %v403
        %429 = vst [vmem:[%s176 + $0x60] sm:$0xff] %v407
        %430 = vst.msk [vmem:[%s176 + $0x68] sm:$0xff] %vm279, %v409
        %431 = vst [vmem:[%s176 + $0x70] sm:$0xff] %v413
        %432 = vst.msk [vmem:[%s176 + $0x78] sm:$0xff] %vm279, %v415
        %433 = vset.pattern.permute.xlu0 1
        %434 = vperm.xlu0 %433, %v222
        %v435 = vpop.permute.xlu0 %434
        %436 = vset.pattern.permute.xlu0 1
        %437 = vperm.xlu0 %436, %v224
        %v438 = vpop.permute.xlu0 %437
        %439 = vset.pattern.permute.xlu0 1
        %440 = vperm.xlu0 %439, %v226
        %v441 = vpop.permute.xlu0 %440
        %442 = vset.pattern.permute.xlu0 1
        %443 = vperm.xlu0 %442, %v228
        %v444 = vpop.permute.xlu0 %443
        %445 = vset.pattern.permute.xlu0 1
        %446 = vperm.xlu0 %445, %v230
        %v447 = vpop.permute.xlu0 %446
        %448 = vset.pattern.permute.xlu0 1
        %449 = vperm.xlu0 %448, %v232
        %v450 = vpop.permute.xlu0 %449
        %451 = vset.pattern.permute.xlu0 1
        %452 = vperm.xlu0 %451, %v234
        %v453 = vpop.permute.xlu0 %452
        %454 = vset.pattern.permute.xlu0 1
        %455 = vperm.xlu0 %454, %v236
        %v456 = vpop.permute.xlu0 %455
        %vm457 = vcmp.eq.s32.totalorder %v238, %v435
        %vm458 = vcmp.eq.s32.totalorder %v238, %v438
        %vm459 = vcmp.eq.s32.totalorder %v238, %v441
        %vm460 = vcmp.eq.s32.totalorder %v238, %v444
        %vm461 = vcmp.eq.s32.totalorder %v238, %v447
        %vm462 = vcmp.eq.s32.totalorder %v238, %v450
        %vm463 = vcmp.eq.s32.totalorder %v238, %v453
        %vm464 = vcmp.eq.s32.totalorder %v238, %v456
        %v465 = vsel %vm457, 1.0, 0.0
        %v466 = vsel %vm458, 1.0, 0.0
        %v467 = vsel %vm459, 1.0, 0.0
        %v468 = vsel %vm460, 1.0, 0.0
        %v469 = vsel %vm461, 1.0, 0.0
        %v470 = vsel %vm462, 1.0, 0.0
        %v471 = vsel %vm463, 1.0, 0.0
        %v472 = vsel %vm464, 1.0, 0.0
        %v474 = vsel %vm279, %v465, 0
        %v477 = vsel %vm279, %v466, 0
        %v480 = vsel %vm279, %v467, 0
        %v483 = vsel %vm279, %v468, 0
        %v486 = vsel %vm279, %v469, 0
        %v489 = vsel %vm279, %v470, 0
        %v492 = vsel %vm279, %v471, 0
        %v495 = vsel %vm279, %v472, 0
        %497 = vmatprep.subr.mxu0 0.0
        %498 = vmatpush1.msra.mxu0 0.0
        %499 = vmatprep.subr.mxu0 0.0
        %500 = vmatpush1.msra.mxu0 0.0
        %501 = vmatprep.subr.mxu0 0.0
        %502 = vmatpush1.msra.mxu0 0.0
        %503 = vmatprep.subr.mxu0 0.0
        %504 = vmatpush1.msra.mxu0 0.0
        %505 = vmatprep.subr.mxu0 0.0
        %506 = vmatpush1.msra.mxu0 0.0
        %507 = vmatprep.subr.mxu0 0.0
        %508 = vmatpush1.msra.mxu0 0.0
        %509 = vmatprep.subr.mxu0 0.0
        %510 = vmatpush1.msra.mxu0 0.0
        %511 = vmatprep.subr.mxu0 0.0
        %512 = vmatpush1.msra.mxu0 0.0
        %513 = vmatprep.subr.mxu0 0.0
        %514 = vmatpush1.msra.mxu0 0.0
        %515 = vmatprep.subr.mxu0 0.0
        %516 = vmatpush1.msra.mxu0 0.0
        %517 = vmatprep.subr.mxu0 0.0
        %518 = vmatpush1.msra.mxu0 0.0
        %519 = vmatprep.subr.mxu0 0.0
        %520 = vmatpush1.msra.mxu0 0.0
        %521 = vmatprep.subr.mxu0 0.0
        %522 = vmatpush1.msra.mxu0 0.0
        %523 = vmatprep.subr.mxu0 0.0
        %524 = vmatpush1.msra.mxu0 0.0
        %525 = vmatprep.subr.mxu0 %v196
        %526 = vmatpush1.msra.mxu0 %v195
        %527 = vmatprep.subr.mxu0 %v194
        %528 = vmatpush1.msra.mxu0 %v193
        %529 = vmatprep.subr.mxu0 0.0
        %530 = vmatpush2.msra.mxu0 0.0
        %531 = vmatprep.subr.mxu0 0.0
        %532 = vmatpush2.msra.mxu0 0.0
        %533 = vmatprep.subr.mxu0 0.0
        %534 = vmatpush2.msra.mxu0 0.0
        %535 = vmatprep.subr.mxu0 0.0
        %536 = vmatpush2.msra.mxu0 0.0
        %537 = vmatprep.subr.mxu0 0.0
        %538 = vmatpush2.msra.mxu0 0.0
        %539 = vmatprep.subr.mxu0 0.0
        %540 = vmatpush2.msra.mxu0 0.0
        %541 = vmatprep.subr.mxu0 0.0
        %542 = vmatpush2.msra.mxu0 0.0
        %543 = vmatprep.subr.mxu0 0.0
        %544 = vmatpush2.msra.mxu0 0.0
        %545 = vmatprep.subr.mxu0 0.0
        %546 = vmatpush2.msra.mxu0 0.0
        %547 = vmatprep.subr.mxu0 0.0
        %548 = vmatpush2.msra.mxu0 0.0
        %549 = vmatprep.subr.mxu0 0.0
        %550 = vmatpush2.msra.mxu0 0.0
        %551 = vmatprep.subr.mxu0 0.0
        %552 = vmatpush2.msra.mxu0 0.0
        %553 = vmatprep.subr.mxu0 0.0
        %554 = vmatpush2.msra.mxu0 0.0
        %555 = vmatprep.subr.mxu0 0.0
        %556 = vmatpush2.msra.mxu0 0.0
        %557 = vmatprep.subr.mxu0 0.0
        %558 = vmatpush2.msra.mxu0 0.0
        %559 = vmatprep.subr.mxu0 0.0
        %560 = vmatpush2.msra.mxu0 0.0
        %561 = vmatprep.mubr.f32.mxu0 0.0
        %562 = vmatmul.mubr.f32.gmra.mxu0 %v474
        %v563 = vpop.f32.mrf.mxu0
        %v564 = vadd.f32 0.0, %v563
        %v565 = vpop.f32.mrf.mxu0
        %v566 = vadd.f32 0.0, %v565
        %567 = vmatprep.mubr.f32.mxu0 0.0
        %568 = vmatmul.mubr.f32.gmra.mxu0 %v477
        %v569 = vpop.f32.mrf.mxu0
        %v570 = vadd.f32 0.0, %v569
        %v571 = vpop.f32.mrf.mxu0
        %v572 = vadd.f32 0.0, %v571
        %573 = vmatprep.mubr.f32.mxu0 0.0
        %574 = vmatmul.mubr.f32.gmra.mxu0 %v480
        %v575 = vpop.f32.mrf.mxu0
        %v576 = vadd.f32 0.0, %v575
        %v577 = vpop.f32.mrf.mxu0
        %v578 = vadd.f32 0.0, %v577
        %579 = vmatprep.mubr.f32.mxu0 0.0
        %580 = vmatmul.mubr.f32.gmra.mxu0 %v483
        %v581 = vpop.f32.mrf.mxu0
        %v582 = vadd.f32 0.0, %v581
        %v583 = vpop.f32.mrf.mxu0
        %v584 = vadd.f32 0.0, %v583
        %585 = vmatprep.mubr.f32.mxu0 0.0
        %586 = vmatmul.mubr.f32.gmra.mxu0 %v486
        %v587 = vpop.f32.mrf.mxu0
        %v588 = vadd.f32 0.0, %v587
        %v589 = vpop.f32.mrf.mxu0
        %v590 = vadd.f32 0.0, %v589
        %591 = vmatprep.mubr.f32.mxu0 0.0
        %592 = vmatmul.mubr.f32.gmra.mxu0 %v489
        %v593 = vpop.f32.mrf.mxu0
        %v594 = vadd.f32 0.0, %v593
        %v595 = vpop.f32.mrf.mxu0
        %v596 = vadd.f32 0.0, %v595
        %597 = vmatprep.mubr.f32.mxu0 0.0
        %598 = vmatmul.mubr.f32.gmra.mxu0 %v492
        %v599 = vpop.f32.mrf.mxu0
        %v600 = vadd.f32 0.0, %v599
        %v601 = vpop.f32.mrf.mxu0
        %v602 = vadd.f32 0.0, %v601
        %603 = vmatprep.mubr.f32.mxu0 0.0
        %604 = vmatmul.mubr.f32.gmra.mxu0 %v495
        %v605 = vpop.f32.mrf.mxu0
        %v606 = vadd.f32 0.0, %v605
        %v607 = vpop.f32.mrf.mxu0
        %v608 = vadd.f32 0.0, %v607
        %609 = vdwg.mxu0
        %s610 = scalar_lea.vmem %s176, 128 [#allocation2]
        %611 = vst [vmem:[%s610] sm:$0xff] %v564
        %612 = vst.msk [vmem:[%s610 + $0x8] sm:$0xff] %vm279, %v566
        %613 = vst [vmem:[%s610 + $0x10] sm:$0xff] %v570
        %614 = vst.msk [vmem:[%s610 + $0x18] sm:$0xff] %vm279, %v572
        %615 = vst [vmem:[%s610 + $0x20] sm:$0xff] %v576
        %616 = vst.msk [vmem:[%s610 + $0x28] sm:$0xff] %vm279, %v578
        %617 = vst [vmem:[%s610 + $0x30] sm:$0xff] %v582
        %618 = vst.msk [vmem:[%s610 + $0x38] sm:$0xff] %vm279, %v584
        %619 = vst [vmem:[%s610 + $0x40] sm:$0xff] %v588
        %620 = vst.msk [vmem:[%s610 + $0x48] sm:$0xff] %vm279, %v590
        %621 = vst [vmem:[%s610 + $0x50] sm:$0xff] %v594
        %622 = vst.msk [vmem:[%s610 + $0x58] sm:$0xff] %vm279, %v596
        %623 = vst [vmem:[%s610 + $0x60] sm:$0xff] %v600
        %624 = vst.msk [vmem:[%s610 + $0x68] sm:$0xff] %vm279, %v602
        %625 = vst [vmem:[%s610 + $0x70] sm:$0xff] %v606
        %626 = vst.msk [vmem:[%s610 + $0x78] sm:$0xff] %vm279, %v608
        %627 = vset.pattern.permute.xlu0 2
        %628 = vperm.xlu0 %627, %v222
        %v629 = vpop.permute.xlu0 %628
        %630 = vset.pattern.permute.xlu0 2
        %631 = vperm.xlu0 %630, %v224
        %v632 = vpop.permute.xlu0 %631
        %633 = vset.pattern.permute.xlu0 2
        %634 = vperm.xlu0 %633, %v226
        %v635 = vpop.permute.xlu0 %634
        %636 = vset.pattern.permute.xlu0 2
        %637 = vperm.xlu0 %636, %v228
        %v638 = vpop.permute.xlu0 %637
        %639 = vset.pattern.permute.xlu0 2
        %640 = vperm.xlu0 %639, %v230
        %v641 = vpop.permute.xlu0 %640
        %642 = vset.pattern.permute.xlu0 2
        %643 = vperm.xlu0 %642, %v232
        %v644 = vpop.permute.xlu0 %643
        %645 = vset.pattern.permute.xlu0 2
        %646 = vperm.xlu0 %645, %v234
        %v647 = vpop.permute.xlu0 %646
        %648 = vset.pattern.permute.xlu0 2
        %649 = vperm.xlu0 %648, %v236
        %v650 = vpop.permute.xlu0 %649
        %vm651 = vcmp.eq.s32.totalorder %v238, %v629
        %vm652 = vcmp.eq.s32.totalorder %v238, %v632
        %vm653 = vcmp.eq.s32.totalorder %v238, %v635
        %vm654 = vcmp.eq.s32.totalorder %v238, %v638
        %vm655 = vcmp.eq.s32.totalorder %v238, %v641
        %vm656 = vcmp.eq.s32.totalorder %v238, %v644
        %vm657 = vcmp.eq.s32.totalorder %v238, %v647
        %vm658 = vcmp.eq.s32.totalorder %v238, %v650
        %v659 = vsel %vm651, 1.0, 0.0
        %v660 = vsel %vm652, 1.0, 0.0
        %v661 = vsel %vm653, 1.0, 0.0
        %v662 = vsel %vm654, 1.0, 0.0
        %v663 = vsel %vm655, 1.0, 0.0
        %v664 = vsel %vm656, 1.0, 0.0
        %v665 = vsel %vm657, 1.0, 0.0
        %v666 = vsel %vm658, 1.0, 0.0
        %v668 = vsel %vm279, %v659, 0
        %v671 = vsel %vm279, %v660, 0
        %v674 = vsel %vm279, %v661, 0
        %v677 = vsel %vm279, %v662, 0
        %v680 = vsel %vm279, %v663, 0
        %v683 = vsel %vm279, %v664, 0
        %v686 = vsel %vm279, %v665, 0
        %v689 = vsel %vm279, %v666, 0
        %691 = vmatprep.subr.mxu0 0.0
        %692 = vmatpush1.msra.mxu0 0.0
        %693 = vmatprep.subr.mxu0 0.0
        %694 = vmatpush1.msra.mxu0 0.0
        %695 = vmatprep.subr.mxu0 0.0
        %696 = vmatpush1.msra.mxu0 0.0
        %697 = vmatprep.subr.mxu0 0.0
        %698 = vmatpush1.msra.mxu0 0.0
        %699 = vmatprep.subr.mxu0 0.0
        %700 = vmatpush1.msra.mxu0 0.0
        %701 = vmatprep.subr.mxu0 0.0
        %702 = vmatpush1.msra.mxu0 0.0
        %703 = vmatprep.subr.mxu0 0.0
        %704 = vmatpush1.msra.mxu0 0.0
        %705 = vmatprep.subr.mxu0 0.0
        %706 = vmatpush1.msra.mxu0 0.0
        %707 = vmatprep.subr.mxu0 0.0
        %708 = vmatpush1.msra.mxu0 0.0
        %709 = vmatprep.subr.mxu0 0.0
        %710 = vmatpush1.msra.mxu0 0.0
        %711 = vmatprep.subr.mxu0 0.0
        %712 = vmatpush1.msra.mxu0 0.0
        %713 = vmatprep.subr.mxu0 0.0
        %714 = vmatpush1.msra.mxu0 0.0
        %715 = vmatprep.subr.mxu0 0.0
        %716 = vmatpush1.msra.mxu0 0.0
        %717 = vmatprep.subr.mxu0 0.0
        %718 = vmatpush1.msra.mxu0 0.0
        %719 = vmatprep.subr.mxu0 %v196
        %720 = vmatpush1.msra.mxu0 %v195
        %721 = vmatprep.subr.mxu0 %v194
        %722 = vmatpush1.msra.mxu0 %v193
        %723 = vmatprep.subr.mxu0 0.0
        %724 = vmatpush2.msra.mxu0 0.0
        %725 = vmatprep.subr.mxu0 0.0
        %726 = vmatpush2.msra.mxu0 0.0
        %727 = vmatprep.subr.mxu0 0.0
        %728 = vmatpush2.msra.mxu0 0.0
        %729 = vmatprep.subr.mxu0 0.0
        %730 = vmatpush2.msra.mxu0 0.0
        %731 = vmatprep.subr.mxu0 0.0
        %732 = vmatpush2.msra.mxu0 0.0
        %733 = vmatprep.subr.mxu0 0.0
        %734 = vmatpush2.msra.mxu0 0.0
        %735 = vmatprep.subr.mxu0 0.0
        %736 = vmatpush2.msra.mxu0 0.0
        %737 = vmatprep.subr.mxu0 0.0
        %738 = vmatpush2.msra.mxu0 0.0
        %739 = vmatprep.subr.mxu0 0.0
        %740 = vmatpush2.msra.mxu0 0.0
        %741 = vmatprep.subr.mxu0 0.0
        %742 = vmatpush2.msra.mxu0 0.0
        %743 = vmatprep.subr.mxu0 0.0
        %744 = vmatpush2.msra.mxu0 0.0
        %745 = vmatprep.subr.mxu0 0.0
        %746 = vmatpush2.msra.mxu0 0.0
        %747 = vmatprep.subr.mxu0 0.0
        %748 = vmatpush2.msra.mxu0 0.0
        %749 = vmatprep.subr.mxu0 0.0
        %750 = vmatpush2.msra.mxu0 0.0
        %751 = vmatprep.subr.mxu0 0.0
        %752 = vmatpush2.msra.mxu0 0.0
        %753 = vmatprep.subr.mxu0 0.0
        %754 = vmatpush2.msra.mxu0 0.0
        %755 = vmatprep.mubr.f32.mxu0 0.0
        %756 = vmatmul.mubr.f32.gmra.mxu0 %v668
        %v757 = vpop.f32.mrf.mxu0
        %v758 = vadd.f32 0.0, %v757
        %v759 = vpop.f32.mrf.mxu0
        %v760 = vadd.f32 0.0, %v759
        %761 = vmatprep.mubr.f32.mxu0 0.0
        %762 = vmatmul.mubr.f32.gmra.mxu0 %v671
        %v763 = vpop.f32.mrf.mxu0
        %v764 = vadd.f32 0.0, %v763
        %v765 = vpop.f32.mrf.mxu0
        %v766 = vadd.f32 0.0, %v765
        %767 = vmatprep.mubr.f32.mxu0 0.0
        %768 = vmatmul.mubr.f32.gmra.mxu0 %v674
        %v769 = vpop.f32.mrf.mxu0
        %v770 = vadd.f32 0.0, %v769
        %v771 = vpop.f32.mrf.mxu0
        %v772 = vadd.f32 0.0, %v771
        %773 = vmatprep.mubr.f32.mxu0 0.0
        %774 = vmatmul.mubr.f32.gmra.mxu0 %v677
        %v775 = vpop.f32.mrf.mxu0
        %v776 = vadd.f32 0.0, %v775
        %v777 = vpop.f32.mrf.mxu0
        %v778 = vadd.f32 0.0, %v777
        %779 = vmatprep.mubr.f32.mxu0 0.0
        %780 = vmatmul.mubr.f32.gmra.mxu0 %v680
        %v781 = vpop.f32.mrf.mxu0
        %v782 = vadd.f32 0.0, %v781
        %v783 = vpop.f32.mrf.mxu0
        %v784 = vadd.f32 0.0, %v783
        %785 = vmatprep.mubr.f32.mxu0 0.0
        %786 = vmatmul.mubr.f32.gmra.mxu0 %v683
        %v787 = vpop.f32.mrf.mxu0
        %v788 = vadd.f32 0.0, %v787
        %v789 = vpop.f32.mrf.mxu0
        %v790 = vadd.f32 0.0, %v789
        %791 = vmatprep.mubr.f32.mxu0 0.0
        %792 = vmatmul.mubr.f32.gmra.mxu0 %v686
        %v793 = vpop.f32.mrf.mxu0
        %v794 = vadd.f32 0.0, %v793
        %v795 = vpop.f32.mrf.mxu0
        %v796 = vadd.f32 0.0, %v795
        %797 = vmatprep.mubr.f32.mxu0 0.0
        %798 = vmatmul.mubr.f32.gmra.mxu0 %v689
        %v799 = vpop.f32.mrf.mxu0
        %v800 = vadd.f32 0.0, %v799
        %v801 = vpop.f32.mrf.mxu0
        %v802 = vadd.f32 0.0, %v801
        %803 = vdwg.mxu0
        %s804 = scalar_lea.vmem %s176, 256 [#allocation2]
        %805 = vst [vmem:[%s804] sm:$0xff] %v758
        %806 = vst.msk [vmem:[%s804 + $0x8] sm:$0xff] %vm279, %v760
        %807 = vst [vmem:[%s804 + $0x10] sm:$0xff] %v764
        %808 = vst.msk [vmem:[%s804 + $0x18] sm:$0xff] %vm279, %v766
        %809 = vst [vmem:[%s804 + $0x20] sm:$0xff] %v770
        %810 = vst.msk [vmem:[%s804 + $0x28] sm:$0xff] %vm279, %v772
        %811 = vst [vmem:[%s804 + $0x30] sm:$0xff] %v776
        %812 = vst.msk [vmem:[%s804 + $0x38] sm:$0xff] %vm279, %v778
        %813 = vst [vmem:[%s804 + $0x40] sm:$0xff] %v782
        %814 = vst.msk [vmem:[%s804 + $0x48] sm:$0xff] %vm279, %v784
        %815 = vst [vmem:[%s804 + $0x50] sm:$0xff] %v788
        %816 = vst.msk [vmem:[%s804 + $0x58] sm:$0xff] %vm279, %v790
        %817 = vst [vmem:[%s804 + $0x60] sm:$0xff] %v794
        %818 = vst.msk [vmem:[%s804 + $0x68] sm:$0xff] %vm279, %v796
        %819 = vst [vmem:[%s804 + $0x70] sm:$0xff] %v800
        %820 = vst.msk [vmem:[%s804 + $0x78] sm:$0xff] %vm279, %v802
        %s821 = sand.u32 %s92, 1
        %s822 = scalar_lea.sflag [#allocation3], %s821
        %s823 = sand.u32 %s92, 1
        %s824 = smul.addr %s823, 384
        %s825 = scalar_lea.vmem [#allocation2], %s824
        // Predicated region
        $region29: #{tpu_custom_call.1} parent=27 // pred_check
          %p826 = pneg %p102
        $region30: #{tpu_custom_call.1} parent=27 // pred_check_branch
          %828 = sbr.rel (%p826) target = $region32
        $region31: #{tpu_custom_call.1} parent=27 // pred_region
          %s829 = smul.u32 8, %s21
          %s831 = ssub.s32 6144, 6144
          %832 = vsyncadd %s822, %s831
          %s833 = smul.addr %s829, 2
          %s834 = smul.addr %s20, 48
          %s835 = sadd.s32 %s833, %s834
          %s836 = smul.addr %s835, 128
          %s837 = scalar_lea.hbm %s2, %s836
          %s838 = sshll.u32 %s825, 4
          %s839 = int_to_ptr.vmem [resolvable:$true] %s838
          %844 = dma.vmem_to_hbm [thread:$0]  %s839, 6144, %s837, %s822, 256, 256, 16
        $region32: #{tpu_custom_call.1} parent=27 // pred_fallthru
          _
      $region28: #{tpu_custom_call.1} parent=5 // pred_fallthru
        _
      %p845 = scmp.le.s32.totalorder 2, %s11
      // Predicated region
      $region33: #{tpu_custom_call.1} parent=5 // pred_check
        %p846 = pneg %p845
      $region34: #{tpu_custom_call.1} parent=5 // pred_check_branch
        %848 = sbr.rel (%p846) target = $region36
      $region35: #{tpu_custom_call.1} parent=5 // pred_region
        %s849 = ssub.s32 %s11, 2
        // Predicated region
        $region37: #{tpu_custom_call.1} parent=35 // pred_check
          %p850 = pneg %p108
        $region38: #{tpu_custom_call.1} parent=35 // pred_check_branch
          %852 = sbr.rel (%p850) target = $region40
        $region39: #{tpu_custom_call.1} parent=35 // pred_region
          %s853 = sand.u32 %s93, 1
          %s854 = scalar_lea.sflag [#allocation3], %s853
          %s855 = sand.u32 %s93, 1
          %s856 = smul.addr %s855, 384
          %s857 = scalar_lea.vmem [#allocation2], %s856
          %858 = dma.done %s854, 6144
        $region40: #{tpu_custom_call.1} parent=35 // pred_fallthru
          _
      $region36: #{tpu_custom_call.1} parent=5 // pred_fallthru
        _
    $region6: #{tpu_custom_call.1} parent=1 // loop_footer
      %s15 = sadd.s32 1, %s11
    $region7: #{tpu_custom_call.1} parent=1 // loop_footer_branch
      %10 = sbr.rel target = $region3
    $region8: #{tpu_custom_call.1} parent=1 // loop_exit
      _
    %859 = vsyncpa [#allocation3], 1
    %s860 = scalar_lea.sflag [#allocation3], 1
    %861 = vsyncpa %s860, 1

</llo_original>
